<compile_context>
chip_gen: v7x
topology: tpu7x:2x2x1
jax: 0.10.0
libtpu: 0.0.40
codegen_flags: <defaults>
</compile_context>

<pallas_src>
import functools

import jax
import jax.numpy as jnp
from jax.experimental import pallas as pl
from jax.experimental.pallas import tpu as pltpu

_LANE = 128          # vreg lane width -> pad feature dims to a multiple of this
_SUBLANE = 8         # vreg sublane count -> batch tiles are multiples of this
_MAX_BATCH_TILE = 512  # 128-aligned; amortizes the ~0.35 us per-grid-step cost


def _round_up(x, m):
    return ((x + m - 1) // m) * m


def _pick_batch_tile(B, Hp):
    """Largest useful 128-aligned batch tile, with >=2 tiles for moderate B."""
    cap = _MAX_BATCH_TILE
    if Hp > 512:
        # Scale the cap down for wide hidden layers so the f32 activation
        # working set (tb * Hp * 4B) stays comfortably inside scoped VMEM.
        cap = max(_LANE, (_MAX_BATCH_TILE * 512 // Hp) // _LANE * _LANE)
    if B < 2 * _LANE:
        # Small batch: a single sublane-aligned tile; splitting only adds
        # padding and per-step overhead.
        return _round_up(max(B, 1), _SUBLANE)
    # Moderate/large batch: 128-aligned tiles, capped at ceil(B/2) so there
    # are at least two grid steps (feeds both TensorCores on v7x).
    half = _round_up(-(-B // 2), _LANE)
    return min(cap, half)


def _vmem_limit_bytes(tb, K, Hp, Pout, n_mid_stack, w_itemsize):
    """Conservative scoped-VMEM request for the chosen tiling."""
    io = 2 * tb * K * 4 + 2 * tb * Pout * 4                      # dbl-buffered in/out tiles
    w = 2 * (K * Hp + n_mid_stack * Hp * Hp + Hp * Pout) * w_itemsize
    b = 2 * ((1 + n_mid_stack) * Hp + Pout) * 4                  # biases kept f32
    act = 2 * tb * Hp * 4                                        # f32 activation working set
    est = io + w + b + act
    # Never go below the cross-gen default (32 MiB) and never above v7x's
    # 64 MiB physical per-TC VMEM.
    return int(min(max(32 << 20, 2 * est), 64 << 20))


def _fused_mlp_kernel(x_ref, w0_ref, b0_ref, wm_ref, bm_ref, wo_ref, bo_ref,
                      o_ref, *, n_mid):
    """Whole MLP on one batch tile; activation stays on-chip between layers.

    x_ref : (TB, K)               unpadded input features
    w0_ref: (K, Hp)               layer-0 weight (narrow contraction dim)
    b0_ref: (1, Hp)               layer-0 bias (f32)
    wm_ref: (n_stack, Hp, Hp)     hidden-layer weight stack
    bm_ref: (n_stack, 1, Hp)      hidden-layer bias stack (f32)
    wo_ref: (Hp, Pout)            output weight
    bo_ref: (1, Pout)             output bias (f32)
    o_ref : (TB, Pout)            lane-dense output tile (f32)
    """
    cdt = w0_ref.dtype  # f32 or bf16; dots always accumulate in f32 on the MXU

    h = jnp.dot(x_ref[...].astype(cdt), w0_ref[...],
                preferred_element_type=jnp.float32)
    h = jnp.maximum(h + b0_ref[...], 0.0)

    for l in range(n_mid):  # static unroll; L is small
        h = jnp.dot(h.astype(cdt), wm_ref[l],
                    preferred_element_type=jnp.float32)
        h = jnp.maximum(h + bm_ref[l], 0.0)

    out = jnp.dot(h.astype(cdt), wo_ref[...],
                  preferred_element_type=jnp.float32) + bo_ref[...]
    o_ref[...] = out.astype(o_ref.dtype)


def init_critic_params(key,
                       no_of_inputs=10,
                       no_of_outputs=5,
                       no_of_layers=5,
                       no_of_hidden_units=500,
                       dtype=jnp.float32):
    """nn.Linear-style init U(-1/sqrt(fan_in), 1/sqrt(fan_in)).

    Weights stored as (in_features, out_features) so y = x @ W + b.
    """
    dims = ([no_of_inputs]
            + [no_of_hidden_units] * (no_of_layers - 1)
            + [no_of_outputs])
    params = []
    for i in range(len(dims) - 1):
        fan_in, fan_out = dims[i], dims[i + 1]
        key, kw, kb = jax.random.split(key, 3)
        bound = 1.0 / float(fan_in) ** 0.5
        w = jax.random.uniform(kw, (fan_in, fan_out), dtype, -bound, bound)
        b = jax.random.uniform(kb, (1, fan_out), dtype, -bound, bound)
        params.append((w, b))
    return params


def pack_critic_params(params, compute_dtype=jnp.float32):
    """Pack ONCE at init (do NOT call per-forward).

    Layer 0 keeps its narrow K rows; hidden layers are stacked and padded to
    Hp = round_up(H, 128); the output layer is padded only to
    Pout = round_up(no_of_outputs, 128).  Zero padding is numerically inert
    under ReLU.  Weights are cast to `compute_dtype` (f32 or bf16 MXU
    operands); biases stay f32 for the VPU add.
    """
    n_layers = len(params)
    assert n_layers >= 2, "criticNet always has at least 2 linear layers"
    K = params[0][0].shape[0]
    H = params[0][0].shape[1]
    out_dim = params[-1][0].shape[1]
    Hp = _round_up(H, _LANE)
    Pout = _round_up(out_dim, _LANE)
    n_mid = n_layers - 2
    n_stack = max(n_mid, 1)  # keep a dummy slab for the degenerate L == 2 case

    w0 = jnp.zeros((K, Hp), compute_dtype)
    w0 = w0.at[:, :H].set(params[0][0].astype(compute_dtype))
    b0 = jnp.zeros((1, Hp), jnp.float32)
    b0 = b0.at[:, :H].set(params[0][1].astype(jnp.float32))

    wm = jnp.zeros((n_stack, Hp, Hp), compute_dtype)
    bm = jnp.zeros((n_stack, 1, Hp), jnp.float32)
    for l in range(n_mid):
        w, b = params[1 + l]
        wm = wm.at[l, : w.shape[0], : w.shape[1]].set(w.astype(compute_dtype))
        bm = bm.at[l, :, : b.shape[1]].set(b.astype(jnp.float32))

    wo = jnp.zeros((Hp, Pout), compute_dtype)
    wo = wo.at[: params[-1][0].shape[0], :out_dim].set(
        params[-1][0].astype(compute_dtype))
    bo = jnp.zeros((1, Pout), jnp.float32)
    bo = bo.at[:, :out_dim].set(params[-1][1].astype(jnp.float32))

    return dict(w0=w0, b0=b0, wm=wm, bm=bm, wo=wo, bo=bo,
                n_mid=n_mid, out_dim=out_dim)


def fused_critic_forward(x, packed):
    """Forward pass; all per-layer compute runs inside one Pallas kernel."""
    w0, b0 = packed["w0"], packed["b0"]
    wm, bm = packed["wm"], packed["bm"]
    wo, bo = packed["wo"], packed["bo"]
    n_mid, out_dim = packed["n_mid"], packed["out_dim"]

    B, K = x.shape
    Kw, Hp = w0.shape
    assert K == Kw, (K, Kw)
    n_stack = wm.shape[0]
    Pout = wo.shape[1]

    tb = _pick_batch_tile(B, Hp)
    b_total = _round_up(B, tb)
    n_tiles = b_total // tb

    # Only the batch dim ever gets padded (features stay at their real width).
    x_in = x if b_total == B else jnp.zeros((b_total, K), x.dtype).at[:B].set(x)

    kernel = functools.partial(_fused_mlp_kernel, n_mid=n_mid)
    vmem_bytes = _vmem_limit_bytes(tb, K, Hp, Pout, n_stack,
                                   jnp.dtype(w0.dtype).itemsize)

    out_pad = pl.pallas_call(
        kernel,
        out_shape=jax.ShapeDtypeStruct((b_total, Pout), jnp.float32),
        grid=(n_tiles,),
        in_specs=[
            pl.BlockSpec((tb, K), lambda i: (i, 0)),            # batch-tiled input
            pl.BlockSpec((K, Hp), lambda i: (0, 0)),            # layer-0 weight
            pl.BlockSpec((1, Hp), lambda i: (0, 0)),            # layer-0 bias
            pl.BlockSpec((n_stack, Hp, Hp), lambda i: (0, 0, 0)),  # hidden weights
            pl.BlockSpec((n_stack, 1, Hp), lambda i: (0, 0, 0)),   # hidden biases
            pl.BlockSpec((Hp, Pout), lambda i: (0, 0)),         # output weight
            pl.BlockSpec((1, Pout), lambda i: (0, 0)),          # output bias
        ],
        out_specs=pl.BlockSpec((tb, Pout), lambda i: (i, 0)),
        compiler_params=pltpu.CompilerParams(
            dimension_semantics=("parallel",),
            vmem_limit_bytes=vmem_bytes,
        ),
    )(x_in, w0, b0, wm, bm, wo, bo)

    return out_pad[:B, :out_dim]


def critic_net_forward(x, params, compute_dtype=jnp.float32):
    """Convenience wrapper (packs per call -- prefer packing once at init)."""
    packed = pack_critic_params(params, compute_dtype=compute_dtype)
    return fused_critic_forward(x, packed)


def critic_net_reference(x, params):
    """Plain-JAX reference for correctness checking."""
    h = x
    n_layers = len(params)
    for idx, (w, b) in enumerate(params):
        h = h @ w + b
        if idx != n_layers - 1:
            h = jnp.maximum(h, 0.0)
    return h


if __name__ == "__main__":
    key = jax.random.PRNGKey(0)
    key, kparams, kx, kx2 = jax.random.split(key, 4)

    # Small shapes consistent with the module defaults (10 in, 5 out, 5
    # layers); hidden shrunk to 32 for a quick synthetic run.
    NO_OF_INPUTS = 10
    NO_OF_OUTPUTS = 5
    NO_OF_LAYERS = 5
    HIDDEN = 32
    BATCH = 8

    params = init_critic_params(
        kparams,
        no_of_inputs=NO_OF_INPUTS,
        no_of_outputs=NO_OF_OUTPUTS,
        no_of_layers=NO_OF_LAYERS,
        no_of_hidden_units=HIDDEN,
    )

    # Pack ONCE, reuse across forwards.
    packed_f32 = pack_critic_params(params, compute_dtype=jnp.float32)

    # 1) f32 path, single batch tile.
    x = jax.random.normal(kx, (BATCH, NO_OF_INPUTS), dtype=jnp.float32)
    y = jax.block_until_ready(fused_critic_forward(x, packed_f32))
    y_ref = jax.block_until_ready(critic_net_reference(x, params))
    assert y.shape == (BATCH, NO_OF_OUTPUTS), y.shape
    assert jnp.allclose(y, y_ref, atol=1e-5, rtol=1e-5), "f32 mismatch"

    # 2) f32 path, multi-tile grid (exercises batch padding + >=2 grid steps).
    x2 = jax.random.normal(kx2, (300, NO_OF_INPUTS), dtype=jnp.float32)
    y2 = jax.block_until_ready(fused_critic_forward(x2, packed_f32))
    y2_ref = jax.block_until_ready(critic_net_reference(x2, params))
    assert y2.shape == (300, NO_OF_OUTPUTS), y2.shape
    assert jnp.allclose(y2, y2_ref, atol=1e-5, rtol=1e-5), "tiled f32 mismatch"

    # 3) bf16 MXU operands with f32 accumulation (looser tolerance vs f32 ref).
    packed_bf16 = pack_critic_params(params, compute_dtype=jnp.bfloat16)
    y_bf16 = jax.block_until_ready(fused_critic_forward(x, packed_bf16))
    assert jnp.allclose(y_bf16, y_ref, atol=5e-2, rtol=5e-2), "bf16 mismatch"

    print("KERNEL_OK")
</pallas_src>

<mosaic_0001>
module attributes {stable_mosaic.version = 11 : i64} {
  func.func @_fused_mlp_kernel(%arg0: i32, %arg1: memref<8x10xf32, #tpu.memory_space<vmem>>, %arg2: memref<10x128xf32, #tpu.memory_space<vmem>>, %arg3: memref<1x128xf32, #tpu.memory_space<vmem>>, %arg4: memref<3x128x128xf32, #tpu.memory_space<vmem>>, %arg5: memref<3x1x128xf32, #tpu.memory_space<vmem>>, %arg6: memref<128x128xf32, #tpu.memory_space<vmem>>, %arg7: memref<1x128xf32, #tpu.memory_space<vmem>>, %arg8: memref<8x128xf32, #tpu.memory_space<vmem>>) attributes {dimension_semantics = [#tpu.dimension_semantics<parallel>], iteration_bounds = array<i64: 1>, scalar_prefetch = 0 : i64, scratch_operands = 0 : i64, tpu.core_type = #tpu.core_type<tc>, window_params = [{transform_indices = @transform_0, window_bounds = array<i64: 8, 10>}, {pipeline_mode = #tpu.pipeline_mode<synchronous>, transform_indices = @transform_1, window_bounds = array<i64: 10, 128>}, {pipeline_mode = #tpu.pipeline_mode<synchronous>, transform_indices = @transform_2, window_bounds = array<i64: 1, 128>}, {pipeline_mode = #tpu.pipeline_mode<synchronous>, transform_indices = @transform_3, window_bounds = array<i64: 3, 128, 128>}, {pipeline_mode = #tpu.pipeline_mode<synchronous>, transform_indices = @transform_4, window_bounds = array<i64: 3, 1, 128>}, {pipeline_mode = #tpu.pipeline_mode<synchronous>, transform_indices = @transform_5, window_bounds = array<i64: 128, 128>}, {pipeline_mode = #tpu.pipeline_mode<synchronous>, transform_indices = @transform_6, window_bounds = array<i64: 1, 128>}, {transform_indices = @transform_7, window_bounds = array<i64: 8, 128>}]} {
    %c0 = arith.constant 0 : index
    %c0_0 = arith.constant 0 : index
    %0 = vector.load %arg1[%c0, %c0_0] : memref<8x10xf32, #tpu.memory_space<vmem>>, vector<8x10xf32>
    %c0_1 = arith.constant 0 : index
    %c0_2 = arith.constant 0 : index
    %1 = vector.load %arg2[%c0_1, %c0_2] : memref<10x128xf32, #tpu.memory_space<vmem>>, vector<10x128xf32>
    %cst = arith.constant dense<0.000000e+00> : vector<8x128xf32>
    %2 = tpu.matmul %0, %1, %cst {dimension_numbers = #tpu.dot_dimension_numbers<[1], [0], [0], [1], [0, 0, 1, 1], [], []>} : vector<8x10xf32>, vector<10x128xf32>, vector<8x128xf32> -> vector<8x128xf32>
    %c0_3 = arith.constant 0 : index
    %c0_4 = arith.constant 0 : index
    %3 = vector.load %arg3[%c0_3, %c0_4] : memref<1x128xf32, #tpu.memory_space<vmem>>, vector<1x128xf32>
    %4 = vector.broadcast %3 : vector<1x128xf32> to vector<8x128xf32>
    %5 = arith.addf %2, %4 : vector<8x128xf32>
    %cst_5 = arith.constant 0.000000e+00 : f32
    %6 = vector.broadcast %cst_5 : f32 to vector<8x128xf32>
    %7 = arith.maximumf %5, %6 : vector<8x128xf32>
    %c0_6 = arith.constant 0 : index
    %c0_7 = arith.constant 0 : index
    %c0_8 = arith.constant 0 : index
    %8 = vector.load %arg4[%c0_6, %c0_7, %c0_8] : memref<3x128x128xf32, #tpu.memory_space<vmem>>, vector<1x128x128xf32>
    %9 = vector.shape_cast %8 : vector<1x128x128xf32> to vector<128x128xf32>
    %cst_9 = arith.constant dense<0.000000e+00> : vector<8x128xf32>
    %10 = tpu.matmul %7, %9, %cst_9 {dimension_numbers = #tpu.dot_dimension_numbers<[1], [0], [0], [1], [0, 0, 1, 1], [], []>} : vector<8x128xf32>, vector<128x128xf32>, vector<8x128xf32> -> vector<8x128xf32>
    %c0_10 = arith.constant 0 : index
    %c0_11 = arith.constant 0 : index
    %c0_12 = arith.constant 0 : index
    %11 = vector.load %arg5[%c0_10, %c0_11, %c0_12] : memref<3x1x128xf32, #tpu.memory_space<vmem>>, vector<1x1x128xf32>
    %12 = vector.shape_cast %11 : vector<1x1x128xf32> to vector<1x128xf32>
    %13 = vector.broadcast %12 : vector<1x128xf32> to vector<8x128xf32>
    %14 = arith.addf %10, %13 : vector<8x128xf32>
    %cst_13 = arith.constant 0.000000e+00 : f32
    %15 = vector.broadcast %cst_13 : f32 to vector<8x128xf32>
    %16 = arith.maximumf %14, %15 : vector<8x128xf32>
    %c1 = arith.constant 1 : index
    %c0_14 = arith.constant 0 : index
    %c0_15 = arith.constant 0 : index
    %17 = vector.load %arg4[%c1, %c0_14, %c0_15] : memref<3x128x128xf32, #tpu.memory_space<vmem>>, vector<1x128x128xf32>
    %18 = vector.shape_cast %17 : vector<1x128x128xf32> to vector<128x128xf32>
    %cst_16 = arith.constant dense<0.000000e+00> : vector<8x128xf32>
    %19 = tpu.matmul %16, %18, %cst_16 {dimension_numbers = #tpu.dot_dimension_numbers<[1], [0], [0], [1], [0, 0, 1, 1], [], []>} : vector<8x128xf32>, vector<128x128xf32>, vector<8x128xf32> -> vector<8x128xf32>
    %c1_17 = arith.constant 1 : index
    %c0_18 = arith.constant 0 : index
    %c0_19 = arith.constant 0 : index
    %20 = vector.load %arg5[%c1_17, %c0_18, %c0_19] : memref<3x1x128xf32, #tpu.memory_space<vmem>>, vector<1x1x128xf32>
    %21 = vector.shape_cast %20 : vector<1x1x128xf32> to vector<1x128xf32>
    %22 = vector.broadcast %21 : vector<1x128xf32> to vector<8x128xf32>
    %23 = arith.addf %19, %22 : vector<8x128xf32>
    %cst_20 = arith.constant 0.000000e+00 : f32
    %24 = vector.broadcast %cst_20 : f32 to vector<8x128xf32>
    %25 = arith.maximumf %23, %24 : vector<8x128xf32>
    %c2 = arith.constant 2 : index
    %c0_21 = arith.constant 0 : index
    %c0_22 = arith.constant 0 : index
    %26 = vector.load %arg4[%c2, %c0_21, %c0_22] : memref<3x128x128xf32, #tpu.memory_space<vmem>>, vector<1x128x128xf32>
    %27 = vector.shape_cast %26 : vector<1x128x128xf32> to vector<128x128xf32>
    %cst_23 = arith.constant dense<0.000000e+00> : vector<8x128xf32>
    %28 = tpu.matmul %25, %27, %cst_23 {dimension_numbers = #tpu.dot_dimension_numbers<[1], [0], [0], [1], [0, 0, 1, 1], [], []>} : vector<8x128xf32>, vector<128x128xf32>, vector<8x128xf32> -> vector<8x128xf32>
    %c2_24 = arith.constant 2 : index
    %c0_25 = arith.constant 0 : index
    %c0_26 = arith.constant 0 : index
    %29 = vector.load %arg5[%c2_24, %c0_25, %c0_26] : memref<3x1x128xf32, #tpu.memory_space<vmem>>, vector<1x1x128xf32>
    %30 = vector.shape_cast %29 : vector<1x1x128xf32> to vector<1x128xf32>
    %31 = vector.broadcast %30 : vector<1x128xf32> to vector<8x128xf32>
    %32 = arith.addf %28, %31 : vector<8x128xf32>
    %cst_27 = arith.constant 0.000000e+00 : f32
    %33 = vector.broadcast %cst_27 : f32 to vector<8x128xf32>
    %34 = arith.maximumf %32, %33 : vector<8x128xf32>
    %c0_28 = arith.constant 0 : index
    %c0_29 = arith.constant 0 : index
    %35 = vector.load %arg6[%c0_28, %c0_29] : memref<128x128xf32, #tpu.memory_space<vmem>>, vector<128x128xf32>
    %cst_30 = arith.constant dense<0.000000e+00> : vector<8x128xf32>
    %36 = tpu.matmul %34, %35, %cst_30 {dimension_numbers = #tpu.dot_dimension_numbers<[1], [0], [0], [1], [0, 0, 1, 1], [], []>} : vector<8x128xf32>, vector<128x128xf32>, vector<8x128xf32> -> vector<8x128xf32>
    %c0_31 = arith.constant 0 : index
    %c0_32 = arith.constant 0 : index
    %37 = vector.load %arg7[%c0_31, %c0_32] : memref<1x128xf32, #tpu.memory_space<vmem>>, vector<1x128xf32>
    %38 = vector.broadcast %37 : vector<1x128xf32> to vector<8x128xf32>
    %39 = arith.addf %36, %38 : vector<8x128xf32>
    %c0_33 = arith.constant 0 : index
    %c0_34 = arith.constant 0 : index
    %40 = vector.load %arg8[%c0_33, %c0_34] : memref<8x128xf32, #tpu.memory_space<vmem>>, vector<8x128xf32>
    tpu.vector_store %arg8[%c0_33, %c0_34], %39 {strides = array<i32>} : memref<8x128xf32, #tpu.memory_space<vmem>>, vector<8x128xf32>,
    return
  }
  func.func @transform_0(%arg0: i32) -> (i32, i32) {
    %c0_i32 = arith.constant 0 : i32
    %c0_i32_0 = arith.constant 0 : i32
    return %arg0, %c0_i32 : i32, i32
  }
  func.func @transform_1(%arg0: i32) -> (i32, i32) {
    %c0_i32 = arith.constant 0 : i32
    %c0_i32_0 = arith.constant 0 : i32
    %c0_i32_1 = arith.constant 0 : i32
    return %c0_i32, %c0_i32_0 : i32, i32
  }
  func.func @transform_2(%arg0: i32) -> (i32, i32) {
    %c0_i32 = arith.constant 0 : i32
    %c0_i32_0 = arith.constant 0 : i32
    %c0_i32_1 = arith.constant 0 : i32
    return %c0_i32, %c0_i32_0 : i32, i32
  }
  func.func @transform_3(%arg0: i32) -> (i32, i32, i32) {
    %c0_i32 = arith.constant 0 : i32
    %c0_i32_0 = arith.constant 0 : i32
    %c0_i32_1 = arith.constant 0 : i32
    %c0_i32_2 = arith.constant 0 : i32
    return %c0_i32, %c0_i32_0, %c0_i32_1 : i32, i32, i32
  }
  func.func @transform_4(%arg0: i32) -> (i32, i32, i32) {
    %c0_i32 = arith.constant 0 : i32
    %c0_i32_0 = arith.constant 0 : i32
    %c0_i32_1 = arith.constant 0 : i32
    %c0_i32_2 = arith.constant 0 : i32
    return %c0_i32, %c0_i32_0, %c0_i32_1 : i32, i32, i32
  }
  func.func @transform_5(%arg0: i32) -> (i32, i32) {
    %c0_i32 = arith.constant 0 : i32
    %c0_i32_0 = arith.constant 0 : i32
    %c0_i32_1 = arith.constant 0 : i32
    return %c0_i32, %c0_i32_0 : i32, i32
  }
  func.func @transform_6(%arg0: i32) -> (i32, i32) {
    %c0_i32 = arith.constant 0 : i32
    %c0_i32_0 = arith.constant 0 : i32
    %c0_i32_1 = arith.constant 0 : i32
    return %c0_i32, %c0_i32_0 : i32, i32
  }
  func.func @transform_7(%arg0: i32) -> (i32, i32) {
    %c0_i32 = arith.constant 0 : i32
    %c0_i32_0 = arith.constant 0 : i32
    return %arg0, %c0_i32 : i32, i32
  }
}

</mosaic_0001>

<llo_original>
// kernel: tpu_custom_call.1
$region0: #{tpu_custom_call.1}
  #allocation0 [shape = 'u32[]', space=smem, size = 0x4, offset = 0x4, fixed_abs, tag = 'smem constant byte address 0x4 - core index']
  #allocation1 [shape = 'u32[144,128]{1,0:T(1,128)}', space=vmem, size = 0x12000, scoped, tag = 'internal scratch']
  %s0 = inlined_call_operand.hbm [shape: f32[8,10], index: 0, kind: input, shape index: {}]
  %s1 = inlined_call_operand.hbm [shape: f32[10,128], index: 1, kind: input, shape index: {}]
  %s2 = inlined_call_operand.vmem [shape: f32[1,128], index: 2, kind: input, shape index: {}]
  %s3 = inlined_call_operand.hbm [shape: f32[3,128,128], index: 3, kind: input, shape index: {}]
  %s4 = inlined_call_operand.vmem [shape: f32[3,1,128], index: 4, kind: input, shape index: {}]
  %s5 = inlined_call_operand.hbm [shape: f32[128,128], index: 5, kind: input, shape index: {}]
  %s6 = inlined_call_operand.vmem [shape: f32[1,128], index: 6, kind: input, shape index: {}]
  %s7 = inlined_call_operand.hbm [shape: f32[8,128], index: 7, kind: output, shape index: {}]
  %s8 = sld [smem:[#allocation0]]
  $region54: #{tpu_custom_call.1} parent=0
    _
  %s10 = ssub.s32 1, %s8
  %s11 = scalar_select 0, %s10, %s8
  $region1: #{tpu_custom_call.1} parent=0
    #allocation2 [shape = 'u8[4096]{0}', space=vmem, size = 0x1000, scoped, tag = 'input window, operand 0, single buffered']
    #allocation3 [shape = 's32[1]{0}', space=sflag, size = 0x4, scoped, tag = 'scoped memory for tpu_custom_call.1']
    #allocation4 [shape = 's32[1]{0}', space=sflag, size = 0x4, scoped, tag = 'scoped memory for tpu_custom_call.1']
    #allocation5 [shape = 'u8[8192]{0}', space=vmem, size = 0x2000, scoped, tag = 'input window, operand 1, single buffered']
    #allocation6 [shape = 's32[1]{0}', space=sflag, size = 0x4, scoped, tag = 'scoped memory for tpu_custom_call.1']
    #allocation7 [shape = 'u8[196608]{0}', space=vmem, size = 0x30000, scoped, tag = 'input window, operand 3, single buffered']
    #allocation8 [shape = 'u8[65536]{0}', space=vmem, size = 0x10000, scoped, tag = 'input window, operand 5, single buffered']
    #allocation9 [shape = 's32[1]{0}', space=sflag, size = 0x4, scoped, tag = 'scoped memory for tpu_custom_call.1']
    #allocation10 [shape = 'u8[4096]{0}', space=vmem, size = 0x1000, scoped, tag = 'output window, operand 0, single buffered']
    %12 = vsyncpa [#allocation3], 0
    %13 = vsyncpa [#allocation6], 0
    %14 = vsyncpa [#allocation9], 0
    %15 = vsyncpa [#allocation4], 0
    // Predicated region
    $region2: #{tpu_custom_call.1} parent=1 // pred_check
      _
    $region3: #{tpu_custom_call.1} parent=1 // pred_check_branch
      %17 = sbr.rel (0) target = $region5
    $region4: #{tpu_custom_call.1} parent=1 // pred_region
      %s19 = ssub.s32 128, 128
      %20 = vsyncadd [#allocation3], %s19
      %s22 = sshll.u32 [#allocation2], 4
      %s23 = int_to_ptr.vmem [resolvable:$true] %s22
      %25 = dma.hbm_to_vmem [thread:$0]  %s0, 128, %s23, [#allocation3]
    $region5: #{tpu_custom_call.1} parent=1 // pred_fallthru
      _
    // Predicated region
    $region6: #{tpu_custom_call.1} parent=1 // pred_check
      _
    $region7: #{tpu_custom_call.1} parent=1 // pred_check_branch
      %27 = sbr.rel (0) target = $region9
    $region8: #{tpu_custom_call.1} parent=1 // pred_region
      %s29 = ssub.s32 256, 256
      %30 = vsyncadd [#allocation6], %s29
      %s31 = sshll.u32 [#allocation5], 4
      %s32 = int_to_ptr.vmem [resolvable:$true] %s31
      %37 = dma.hbm_to_vmem [thread:$0]  %s1, 256, %s32, [#allocation6], 128, 128, 8
    $region9: #{tpu_custom_call.1} parent=1 // pred_fallthru
      _
    // Predicated region
    $region10: #{tpu_custom_call.1} parent=1 // pred_check
      _
    $region11: #{tpu_custom_call.1} parent=1 // pred_check_branch
      %39 = sbr.rel (0) target = $region13
    $region12: #{tpu_custom_call.1} parent=1 // pred_region
      _
    $region13: #{tpu_custom_call.1} parent=1 // pred_fallthru
      _
    // Predicated region
    $region14: #{tpu_custom_call.1} parent=1 // pred_check
      _
    $region15: #{tpu_custom_call.1} parent=1 // pred_check_branch
      %41 = sbr.rel (0) target = $region17
    $region16: #{tpu_custom_call.1} parent=1 // pred_region
      %s43 = ssub.s32 6144, 6144
      %44 = vsyncadd [#allocation6], %s43
      %s45 = sshll.u32 [#allocation7], 4
      %s46 = int_to_ptr.vmem [resolvable:$true] %s45
      %51 = dma.hbm_to_vmem [thread:$0]  %s3, 6144, %s46, [#allocation6], 128, 128, 8
    $region17: #{tpu_custom_call.1} parent=1 // pred_fallthru
      _
    // Predicated region
    $region18: #{tpu_custom_call.1} parent=1 // pred_check
      _
    $region19: #{tpu_custom_call.1} parent=1 // pred_check_branch
      %53 = sbr.rel (0) target = $region21
    $region20: #{tpu_custom_call.1} parent=1 // pred_region
      _
    $region21: #{tpu_custom_call.1} parent=1 // pred_fallthru
      _
    // Predicated region
    $region22: #{tpu_custom_call.1} parent=1 // pred_check
      _
    $region23: #{tpu_custom_call.1} parent=1 // pred_check_branch
      %55 = sbr.rel (0) target = $region25
    $region24: #{tpu_custom_call.1} parent=1 // pred_region
      %s57 = ssub.s32 2048, 2048
      %58 = vsyncadd [#allocation9], %s57
      %s59 = sshll.u32 [#allocation8], 4
      %s60 = int_to_ptr.vmem [resolvable:$true] %s59
      %65 = dma.hbm_to_vmem [thread:$0]  %s5, 2048, %s60, [#allocation9], 128, 128, 8
    $region25: #{tpu_custom_call.1} parent=1 // pred_fallthru
      _
    // Predicated region
    $region26: #{tpu_custom_call.1} parent=1 // pred_check
      _
    $region27: #{tpu_custom_call.1} parent=1 // pred_check_branch
      %67 = sbr.rel (0) target = $region29
    $region28: #{tpu_custom_call.1} parent=1 // pred_region
      _
    $region29: #{tpu_custom_call.1} parent=1 // pred_fallthru
      _
    // Predicated region
    $region30: #{tpu_custom_call.1} parent=1 // pred_check
      _
    $region31: #{tpu_custom_call.1} parent=1 // pred_check_branch
      %69 = sbr.rel (0) target = $region33
    $region32: #{tpu_custom_call.1} parent=1 // pred_region
      %70 = dma.done [#allocation3], 128
    $region33: #{tpu_custom_call.1} parent=1 // pred_fallthru
      _
    // Predicated region
    $region34: #{tpu_custom_call.1} parent=1 // pred_check
      _
    $region35: #{tpu_custom_call.1} parent=1 // pred_check_branch
      %72 = sbr.rel (0) target = $region37
    $region36: #{tpu_custom_call.1} parent=1 // pred_region
      %73 = dma.done [#allocation6], 256
    $region37: #{tpu_custom_call.1} parent=1 // pred_fallthru
      _
    // Predicated region
    $region38: #{tpu_custom_call.1} parent=1 // pred_check
      _
    $region39: #{tpu_custom_call.1} parent=1 // pred_check_branch
      %75 = sbr.rel (0) target = $region41
    $region40: #{tpu_custom_call.1} parent=1 // pred_region
      %76 = dma.done [#allocation6], 6144
    $region41: #{tpu_custom_call.1} parent=1 // pred_fallthru
      _
    // Predicated region
    $region42: #{tpu_custom_call.1} parent=1 // pred_check
      _
    $region43: #{tpu_custom_call.1} parent=1 // pred_check_branch
      %78 = sbr.rel (0) target = $region45
    $region44: #{tpu_custom_call.1} parent=1 // pred_region
      %79 = dma.done [#allocation9], 2048
    $region45: #{tpu_custom_call.1} parent=1 // pred_fallthru
      _
    %v80 = vld [vmem:[#allocation2] sm:$0xff]
    %v81 = vld [vmem:[#allocation5] sm:$0xff]
    %v82 = vld [vmem:[#allocation5 + $0x8] sm:$0x3]
    %v83 = vld [vmem:[%s2] sm:$0x1]
    %v85 = vlaneseq
    %v86 = vshrl.u32 %v85, 7
    %v87 = vsub.s32 0, %v86
    %v88 = vrot.slane %v83, %v87
    %vm90 = vcmask 80896
    %v92 = vsel %vm90, %v80, 0
    %vm94 = vcmask 1041408
    %v96 = vsel %vm94, %v82, 0
    %98 = vmatprep.subr.mxu0 0.0
    %99 = vmatpush1.msra.mxu0 %v81
    %100 = vmatprep.subr.mxu0 0.0
    %101 = vmatpush1.msra.mxu0 %v96
    %102 = vmatprep.subr.mxu0 0.0
    %103 = vmatpush1.msra.mxu0 0.0
    %104 = vmatprep.subr.mxu0 0.0
    %105 = vmatpush1.msra.mxu0 0.0
    %106 = vmatprep.subr.mxu0 0.0
    %107 = vmatpush1.msra.mxu0 0.0
    %108 = vmatprep.subr.mxu0 0.0
    %109 = vmatpush1.msra.mxu0 0.0
    %110 = vmatprep.subr.mxu0 0.0
    %111 = vmatpush1.msra.mxu0 0.0
    %112 = vmatprep.subr.mxu0 0.0
    %113 = vmatpush1.msra.mxu0 0.0
    %114 = vmatprep.subr.mxu0 0.0
    %115 = vmatpush1.msra.mxu0 0.0
    %116 = vmatprep.subr.mxu0 0.0
    %117 = vmatpush1.msra.mxu0 0.0
    %118 = vmatprep.subr.mxu0 0.0
    %119 = vmatpush1.msra.mxu0 0.0
    %120 = vmatprep.subr.mxu0 0.0
    %121 = vmatpush1.msra.mxu0 0.0
    %122 = vmatprep.subr.mxu0 0.0
    %123 = vmatpush1.msra.mxu0 0.0
    %124 = vmatprep.subr.mxu0 0.0
    %125 = vmatpush1.msra.mxu0 0.0
    %126 = vmatprep.subr.mxu0 0.0
    %127 = vmatpush1.msra.mxu0 0.0
    %128 = vmatprep.subr.mxu0 0.0
    %129 = vmatpush1.msra.mxu0 0.0
    %130 = vmatprep.subr.mxu0 0.0
    %131 = vmatpush1.msra.mxu0 0.0
    %132 = vmatprep.subr.mxu0 0.0
    %133 = vmatpush1.msra.mxu0 0.0
    %134 = vmatprep.subr.mxu0 0.0
    %135 = vmatpush1.msra.mxu0 0.0
    %136 = vmatprep.subr.mxu0 0.0
    %137 = vmatpush1.msra.mxu0 0.0
    %138 = vmatprep.subr.mxu0 0.0
    %139 = vmatpush1.msra.mxu0 0.0
    %140 = vmatprep.subr.mxu0 0.0
    %141 = vmatpush1.msra.mxu0 0.0
    %142 = vmatprep.subr.mxu0 0.0
    %143 = vmatpush1.msra.mxu0 0.0
    %144 = vmatprep.subr.mxu0 0.0
    %145 = vmatpush1.msra.mxu0 0.0
    %146 = vmatprep.subr.mxu0 0.0
    %147 = vmatpush1.msra.mxu0 0.0
    %148 = vmatprep.subr.mxu0 0.0
    %149 = vmatpush1.msra.mxu0 0.0
    %150 = vmatprep.subr.mxu0 0.0
    %151 = vmatpush1.msra.mxu0 0.0
    %152 = vmatprep.subr.mxu0 0.0
    %153 = vmatpush1.msra.mxu0 0.0
    %154 = vmatprep.subr.mxu0 0.0
    %155 = vmatpush1.msra.mxu0 0.0
    %156 = vmatprep.subr.mxu0 0.0
    %157 = vmatpush1.msra.mxu0 0.0
    %158 = vmatprep.subr.mxu0 0.0
    %159 = vmatpush1.msra.mxu0 0.0
    %160 = vmatprep.subr.mxu0 0.0
    %161 = vmatpush1.msra.mxu0 0.0
    %162 = vmatprep.mubr.f32.mxu0 0.0
    %163 = vmatmul.mubr.f32.gmra.mrb[0].mxu0 %v92
    %v164 = vpop.f32.mrb[0].mxu0
    %v165 = vadd.f32 %v88, %v164
    %v166 = vpop.f32.mrb[0].mxu0
    %167 = vdwg.mxu0
    %v168 = vmax.f32 %v165, 0.0
    %v169 = vld [vmem:[#allocation7] sm:$0xff]
    %v170 = vld [vmem:[#allocation7 + $0x8] sm:$0xff]
    %v171 = vld [vmem:[#allocation7 + $0x10] sm:$0xff]
    %v172 = vld [vmem:[#allocation7 + $0x18] sm:$0xff]
    %v173 = vld [vmem:[#allocation7 + $0x20] sm:$0xff]
    %v174 = vld [vmem:[#allocation7 + $0x28] sm:$0xff]
    %v175 = vld [vmem:[#allocation7 + $0x30] sm:$0xff]
    %v176 = vld [vmem:[#allocation7 + $0x38] sm:$0xff]
    %v177 = vld [vmem:[#allocation7 + $0x40] sm:$0xff]
    %v178 = vld [vmem:[#allocation7 + $0x48] sm:$0xff]
    %v179 = vld [vmem:[#allocation7 + $0x50] sm:$0xff]
    %v180 = vld [vmem:[#allocation7 + $0x58] sm:$0xff]
    %v181 = vld [vmem:[#allocation7 + $0x60] sm:$0xff]
    %v182 = vld [vmem:[#allocation7 + $0x68] sm:$0xff]
    %v183 = vld [vmem:[#allocation7 + $0x70] sm:$0xff]
    %v184 = vld [vmem:[#allocation7 + $0x78] sm:$0xff]
    %v185 = vld [vmem:[%s4] sm:$0x1]
    %v187 = vlaneseq
    %v188 = vshrl.u32 %v187, 7
    %v189 = vsub.s32 0, %v188
    %v190 = vrot.slane %v185, %v189
    %192 = vmatprep.subr.mxu0 0.0
    %193 = vmatpush1.msra.mxu0 %v169
    %194 = vmatprep.subr.mxu0 0.0
    %195 = vmatpush1.msra.mxu0 %v170
    %196 = vmatprep.subr.mxu0 0.0
    %197 = vmatpush1.msra.mxu0 %v171
    %198 = vmatprep.subr.mxu0 0.0
    %199 = vmatpush1.msra.mxu0 %v172
    %200 = vmatprep.subr.mxu0 0.0
    %201 = vmatpush1.msra.mxu0 %v173
    %202 = vmatprep.subr.mxu0 0.0
    %203 = vmatpush1.msra.mxu0 %v174
    %204 = vmatprep.subr.mxu0 0.0
    %205 = vmatpush1.msra.mxu0 %v175
    %206 = vmatprep.subr.mxu0 0.0
    %207 = vmatpush1.msra.mxu0 %v176
    %208 = vmatprep.subr.mxu0 0.0
    %209 = vmatpush1.msra.mxu0 %v177
    %210 = vmatprep.subr.mxu0 0.0
    %211 = vmatpush1.msra.mxu0 %v178
    %212 = vmatprep.subr.mxu0 0.0
    %213 = vmatpush1.msra.mxu0 %v179
    %214 = vmatprep.subr.mxu0 0.0
    %215 = vmatpush1.msra.mxu0 %v180
    %216 = vmatprep.subr.mxu0 0.0
    %217 = vmatpush1.msra.mxu0 %v181
    %218 = vmatprep.subr.mxu0 0.0
    %219 = vmatpush1.msra.mxu0 %v182
    %220 = vmatprep.subr.mxu0 0.0
    %221 = vmatpush1.msra.mxu0 %v183
    %222 = vmatprep.subr.mxu0 0.0
    %223 = vmatpush1.msra.mxu0 %v184
    %224 = vmatprep.subr.mxu0 0.0
    %225 = vmatpush1.msra.mxu0 0.0
    %226 = vmatprep.subr.mxu0 0.0
    %227 = vmatpush1.msra.mxu0 0.0
    %228 = vmatprep.subr.mxu0 0.0
    %229 = vmatpush1.msra.mxu0 0.0
    %230 = vmatprep.subr.mxu0 0.0
    %231 = vmatpush1.msra.mxu0 0.0
    %232 = vmatprep.subr.mxu0 0.0
    %233 = vmatpush1.msra.mxu0 0.0
    %234 = vmatprep.subr.mxu0 0.0
    %235 = vmatpush1.msra.mxu0 0.0
    %236 = vmatprep.subr.mxu0 0.0
    %237 = vmatpush1.msra.mxu0 0.0
    %238 = vmatprep.subr.mxu0 0.0
    %239 = vmatpush1.msra.mxu0 0.0
    %240 = vmatprep.subr.mxu0 0.0
    %241 = vmatpush1.msra.mxu0 0.0
    %242 = vmatprep.subr.mxu0 0.0
    %243 = vmatpush1.msra.mxu0 0.0
    %244 = vmatprep.subr.mxu0 0.0
    %245 = vmatpush1.msra.mxu0 0.0
    %246 = vmatprep.subr.mxu0 0.0
    %247 = vmatpush1.msra.mxu0 0.0
    %248 = vmatprep.subr.mxu0 0.0
    %249 = vmatpush1.msra.mxu0 0.0
    %250 = vmatprep.subr.mxu0 0.0
    %251 = vmatpush1.msra.mxu0 0.0
    %252 = vmatprep.subr.mxu0 0.0
    %253 = vmatpush1.msra.mxu0 0.0
    %254 = vmatprep.subr.mxu0 0.0
    %255 = vmatpush1.msra.mxu0 0.0
    %256 = vmatprep.mubr.f32.mxu0 0.0
    %257 = vmatmul.mubr.f32.gmra.mrb[0].mxu0 %v168
    %v258 = vpop.f32.mrb[0].mxu0
    %v259 = vadd.f32 %v190, %v258
    %v260 = vpop.f32.mrb[0].mxu0
    %261 = vdwg.mxu0
    %v262 = vmax.f32 %v259, 0.0
    %s263 = scalar_lea.vmem [#allocation7], 128
    %v264 = vld [vmem:[%s263] sm:$0xff]
    %v265 = vld [vmem:[%s263 + $0x8] sm:$0xff]
    %v266 = vld [vmem:[%s263 + $0x10] sm:$0xff]
    %v267 = vld [vmem:[%s263 + $0x18] sm:$0xff]
    %v268 = vld [vmem:[%s263 + $0x20] sm:$0xff]
    %v269 = vld [vmem:[%s263 + $0x28] sm:$0xff]
    %v270 = vld [vmem:[%s263 + $0x30] sm:$0xff]
    %v271 = vld [vmem:[%s263 + $0x38] sm:$0xff]
    %v272 = vld [vmem:[%s263 + $0x40] sm:$0xff]
    %v273 = vld [vmem:[%s263 + $0x48] sm:$0xff]
    %v274 = vld [vmem:[%s263 + $0x50] sm:$0xff]
    %v275 = vld [vmem:[%s263 + $0x58] sm:$0xff]
    %v276 = vld [vmem:[%s263 + $0x60] sm:$0xff]
    %v277 = vld [vmem:[%s263 + $0x68] sm:$0xff]
    %v278 = vld [vmem:[%s263 + $0x70] sm:$0xff]
    %v279 = vld [vmem:[%s263 + $0x78] sm:$0xff]
    %s280 = scalar_lea.vmem %s4, 1
    %v281 = vld [vmem:[%s280] sm:$0x1]
    %v283 = vlaneseq
    %v284 = vshrl.u32 %v283, 7
    %v285 = vsub.s32 0, %v284
    %v286 = vrot.slane %v281, %v285
    %288 = vmatprep.subr.mxu0 0.0
    %289 = vmatpush1.msra.mxu0 %v264
    %290 = vmatprep.subr.mxu0 0.0
    %291 = vmatpush1.msra.mxu0 %v265
    %292 = vmatprep.subr.mxu0 0.0
    %293 = vmatpush1.msra.mxu0 %v266
    %294 = vmatprep.subr.mxu0 0.0
    %295 = vmatpush1.msra.mxu0 %v267
    %296 = vmatprep.subr.mxu0 0.0
    %297 = vmatpush1.msra.mxu0 %v268
    %298 = vmatprep.subr.mxu0 0.0
    %299 = vmatpush1.msra.mxu0 %v269
    %300 = vmatprep.subr.mxu0 0.0
    %301 = vmatpush1.msra.mxu0 %v270
    %302 = vmatprep.subr.mxu0 0.0
    %303 = vmatpush1.msra.mxu0 %v271
    %304 = vmatprep.subr.mxu0 0.0
    %305 = vmatpush1.msra.mxu0 %v272
    %306 = vmatprep.subr.mxu0 0.0
    %307 = vmatpush1.msra.mxu0 %v273
    %308 = vmatprep.subr.mxu0 0.0
    %309 = vmatpush1.msra.mxu0 %v274
    %310 = vmatprep.subr.mxu0 0.0
    %311 = vmatpush1.msra.mxu0 %v275
    %312 = vmatprep.subr.mxu0 0.0
    %313 = vmatpush1.msra.mxu0 %v276
    %314 = vmatprep.subr.mxu0 0.0
    %315 = vmatpush1.msra.mxu0 %v277
    %316 = vmatprep.subr.mxu0 0.0
    %317 = vmatpush1.msra.mxu0 %v278
    %318 = vmatprep.subr.mxu0 0.0
    %319 = vmatpush1.msra.mxu0 %v279
    %320 = vmatprep.subr.mxu0 0.0
    %321 = vmatpush1.msra.mxu0 0.0
    %322 = vmatprep.subr.mxu0 0.0
    %323 = vmatpush1.msra.mxu0 0.0
    %324 = vmatprep.subr.mxu0 0.0
    %325 = vmatpush1.msra.mxu0 0.0
    %326 = vmatprep.subr.mxu0 0.0
    %327 = vmatpush1.msra.mxu0 0.0
    %328 = vmatprep.subr.mxu0 0.0
    %329 = vmatpush1.msra.mxu0 0.0
    %330 = vmatprep.subr.mxu0 0.0
    %331 = vmatpush1.msra.mxu0 0.0
    %332 = vmatprep.subr.mxu0 0.0
    %333 = vmatpush1.msra.mxu0 0.0
    %334 = vmatprep.subr.mxu0 0.0
    %335 = vmatpush1.msra.mxu0 0.0
    %336 = vmatprep.subr.mxu0 0.0
    %337 = vmatpush1.msra.mxu0 0.0
    %338 = vmatprep.subr.mxu0 0.0
    %339 = vmatpush1.msra.mxu0 0.0
    %340 = vmatprep.subr.mxu0 0.0
    %341 = vmatpush1.msra.mxu0 0.0
    %342 = vmatprep.subr.mxu0 0.0
    %343 = vmatpush1.msra.mxu0 0.0
    %344 = vmatprep.subr.mxu0 0.0
    %345 = vmatpush1.msra.mxu0 0.0
    %346 = vmatprep.subr.mxu0 0.0
    %347 = vmatpush1.msra.mxu0 0.0
    %348 = vmatprep.subr.mxu0 0.0
    %349 = vmatpush1.msra.mxu0 0.0
    %350 = vmatprep.subr.mxu0 0.0
    %351 = vmatpush1.msra.mxu0 0.0
    %352 = vmatprep.mubr.f32.mxu0 0.0
    %353 = vmatmul.mubr.f32.gmra.mrb[0].mxu0 %v262
    %v354 = vpop.f32.mrb[0].mxu0
    %v355 = vadd.f32 %v286, %v354
    %v356 = vpop.f32.mrb[0].mxu0
    %357 = vdwg.mxu0
    %v358 = vmax.f32 %v355, 0.0
    %s359 = scalar_lea.vmem [#allocation7], 256
    %v360 = vld [vmem:[%s359] sm:$0xff]
    %v361 = vld [vmem:[%s359 + $0x8] sm:$0xff]
    %v362 = vld [vmem:[%s359 + $0x10] sm:$0xff]
    %v363 = vld [vmem:[%s359 + $0x18] sm:$0xff]
    %v364 = vld [vmem:[%s359 + $0x20] sm:$0xff]
    %v365 = vld [vmem:[%s359 + $0x28] sm:$0xff]
    %v366 = vld [vmem:[%s359 + $0x30] sm:$0xff]
    %v367 = vld [vmem:[%s359 + $0x38] sm:$0xff]
    %v368 = vld [vmem:[%s359 + $0x40] sm:$0xff]
    %v369 = vld [vmem:[%s359 + $0x48] sm:$0xff]
    %v370 = vld [vmem:[%s359 + $0x50] sm:$0xff]
    %v371 = vld [vmem:[%s359 + $0x58] sm:$0xff]
    %v372 = vld [vmem:[%s359 + $0x60] sm:$0xff]
    %v373 = vld [vmem:[%s359 + $0x68] sm:$0xff]
    %v374 = vld [vmem:[%s359 + $0x70] sm:$0xff]
    %v375 = vld [vmem:[%s359 + $0x78] sm:$0xff]
    %s376 = scalar_lea.vmem %s4, 2
    %v377 = vld [vmem:[%s376] sm:$0x1]
    %v379 = vlaneseq
    %v380 = vshrl.u32 %v379, 7
    %v381 = vsub.s32 0, %v380
    %v382 = vrot.slane %v377, %v381
    %384 = vmatprep.subr.mxu0 0.0
    %385 = vmatpush1.msra.mxu0 %v360
    %386 = vmatprep.subr.mxu0 0.0
    %387 = vmatpush1.msra.mxu0 %v361
    %388 = vmatprep.subr.mxu0 0.0
    %389 = vmatpush1.msra.mxu0 %v362
    %390 = vmatprep.subr.mxu0 0.0
    %391 = vmatpush1.msra.mxu0 %v363
    %392 = vmatprep.subr.mxu0 0.0
    %393 = vmatpush1.msra.mxu0 %v364
    %394 = vmatprep.subr.mxu0 0.0
    %395 = vmatpush1.msra.mxu0 %v365
    %396 = vmatprep.subr.mxu0 0.0
    %397 = vmatpush1.msra.mxu0 %v366
    %398 = vmatprep.subr.mxu0 0.0
    %399 = vmatpush1.msra.mxu0 %v367
    %400 = vmatprep.subr.mxu0 0.0
    %401 = vmatpush1.msra.mxu0 %v368
    %402 = vmatprep.subr.mxu0 0.0
    %403 = vmatpush1.msra.mxu0 %v369
    %404 = vmatprep.subr.mxu0 0.0
    %405 = vmatpush1.msra.mxu0 %v370
    %406 = vmatprep.subr.mxu0 0.0
    %407 = vmatpush1.msra.mxu0 %v371
    %408 = vmatprep.subr.mxu0 0.0
    %409 = vmatpush1.msra.mxu0 %v372
    %410 = vmatprep.subr.mxu0 0.0
    %411 = vmatpush1.msra.mxu0 %v373
    %412 = vmatprep.subr.mxu0 0.0
    %413 = vmatpush1.msra.mxu0 %v374
    %414 = vmatprep.subr.mxu0 0.0
    %415 = vmatpush1.msra.mxu0 %v375
    %416 = vmatprep.subr.mxu0 0.0
    %417 = vmatpush1.msra.mxu0 0.0
    %418 = vmatprep.subr.mxu0 0.0
    %419 = vmatpush1.msra.mxu0 0.0
    %420 = vmatprep.subr.mxu0 0.0
    %421 = vmatpush1.msra.mxu0 0.0
    %422 = vmatprep.subr.mxu0 0.0
    %423 = vmatpush1.msra.mxu0 0.0
    %424 = vmatprep.subr.mxu0 0.0
    %425 = vmatpush1.msra.mxu0 0.0
    %426 = vmatprep.subr.mxu0 0.0
    %427 = vmatpush1.msra.mxu0 0.0
    %428 = vmatprep.subr.mxu0 0.0
    %429 = vmatpush1.msra.mxu0 0.0
    %430 = vmatprep.subr.mxu0 0.0
    %431 = vmatpush1.msra.mxu0 0.0
    %432 = vmatprep.subr.mxu0 0.0
    %433 = vmatpush1.msra.mxu0 0.0
    %434 = vmatprep.subr.mxu0 0.0
    %435 = vmatpush1.msra.mxu0 0.0
    %436 = vmatprep.subr.mxu0 0.0
    %437 = vmatpush1.msra.mxu0 0.0
    %438 = vmatprep.subr.mxu0 0.0
    %439 = vmatpush1.msra.mxu0 0.0
    %440 = vmatprep.subr.mxu0 0.0
    %441 = vmatpush1.msra.mxu0 0.0
    %442 = vmatprep.subr.mxu0 0.0
    %443 = vmatpush1.msra.mxu0 0.0
    %444 = vmatprep.subr.mxu0 0.0
    %445 = vmatpush1.msra.mxu0 0.0
    %446 = vmatprep.subr.mxu0 0.0
    %447 = vmatpush1.msra.mxu0 0.0
    %448 = vmatprep.mubr.f32.mxu0 0.0
    %449 = vmatmul.mubr.f32.gmra.mrb[0].mxu0 %v358
    %v450 = vpop.f32.mrb[0].mxu0
    %v451 = vadd.f32 %v382, %v450
    %v452 = vpop.f32.mrb[0].mxu0
    %453 = vdwg.mxu0
    %v454 = vmax.f32 %v451, 0.0
    %v455 = vld [vmem:[#allocation8] sm:$0xff]
    %v456 = vld [vmem:[#allocation8 + $0x8] sm:$0xff]
    %v457 = vld [vmem:[#allocation8 + $0x10] sm:$0xff]
    %v458 = vld [vmem:[#allocation8 + $0x18] sm:$0xff]
    %v459 = vld [vmem:[#allocation8 + $0x20] sm:$0xff]
    %v460 = vld [vmem:[#allocation8 + $0x28] sm:$0xff]
    %v461 = vld [vmem:[#allocation8 + $0x30] sm:$0xff]
    %v462 = vld [vmem:[#allocation8 + $0x38] sm:$0xff]
    %v463 = vld [vmem:[#allocation8 + $0x40] sm:$0xff]
    %v464 = vld [vmem:[#allocation8 + $0x48] sm:$0xff]
    %v465 = vld [vmem:[#allocation8 + $0x50] sm:$0xff]
    %v466 = vld [vmem:[#allocation8 + $0x58] sm:$0xff]
    %v467 = vld [vmem:[#allocation8 + $0x60] sm:$0xff]
    %v468 = vld [vmem:[#allocation8 + $0x68] sm:$0xff]
    %v469 = vld [vmem:[#allocation8 + $0x70] sm:$0xff]
    %v470 = vld [vmem:[#allocation8 + $0x78] sm:$0xff]
    %v471 = vld [vmem:[%s6] sm:$0x1]
    %v473 = vlaneseq
    %v474 = vshrl.u32 %v473, 7
    %v475 = vsub.s32 0, %v474
    %v476 = vrot.slane %v471, %v475
    %478 = vmatprep.subr.mxu0 0.0
    %479 = vmatpush1.msra.mxu0 %v455
    %480 = vmatprep.subr.mxu0 0.0
    %481 = vmatpush1.msra.mxu0 %v456
    %482 = vmatprep.subr.mxu0 0.0
    %483 = vmatpush1.msra.mxu0 %v457
    %484 = vmatprep.subr.mxu0 0.0
    %485 = vmatpush1.msra.mxu0 %v458
    %486 = vmatprep.subr.mxu0 0.0
    %487 = vmatpush1.msra.mxu0 %v459
    %488 = vmatprep.subr.mxu0 0.0
    %489 = vmatpush1.msra.mxu0 %v460
    %490 = vmatprep.subr.mxu0 0.0
    %491 = vmatpush1.msra.mxu0 %v461
    %492 = vmatprep.subr.mxu0 0.0
    %493 = vmatpush1.msra.mxu0 %v462
    %494 = vmatprep.subr.mxu0 0.0
    %495 = vmatpush1.msra.mxu0 %v463
    %496 = vmatprep.subr.mxu0 0.0
    %497 = vmatpush1.msra.mxu0 %v464
    %498 = vmatprep.subr.mxu0 0.0
    %499 = vmatpush1.msra.mxu0 %v465
    %500 = vmatprep.subr.mxu0 0.0
    %501 = vmatpush1.msra.mxu0 %v466
    %502 = vmatprep.subr.mxu0 0.0
    %503 = vmatpush1.msra.mxu0 %v467
    %504 = vmatprep.subr.mxu0 0.0
    %505 = vmatpush1.msra.mxu0 %v468
    %506 = vmatprep.subr.mxu0 0.0
    %507 = vmatpush1.msra.mxu0 %v469
    %508 = vmatprep.subr.mxu0 0.0
    %509 = vmatpush1.msra.mxu0 %v470
    %510 = vmatprep.subr.mxu0 0.0
    %511 = vmatpush1.msra.mxu0 0.0
    %512 = vmatprep.subr.mxu0 0.0
    %513 = vmatpush1.msra.mxu0 0.0
    %514 = vmatprep.subr.mxu0 0.0
    %515 = vmatpush1.msra.mxu0 0.0
    %516 = vmatprep.subr.mxu0 0.0
    %517 = vmatpush1.msra.mxu0 0.0
    %518 = vmatprep.subr.mxu0 0.0
    %519 = vmatpush1.msra.mxu0 0.0
    %520 = vmatprep.subr.mxu0 0.0
    %521 = vmatpush1.msra.mxu0 0.0
    %522 = vmatprep.subr.mxu0 0.0
    %523 = vmatpush1.msra.mxu0 0.0
    %524 = vmatprep.subr.mxu0 0.0
    %525 = vmatpush1.msra.mxu0 0.0
    %526 = vmatprep.subr.mxu0 0.0
    %527 = vmatpush1.msra.mxu0 0.0
    %528 = vmatprep.subr.mxu0 0.0
    %529 = vmatpush1.msra.mxu0 0.0
    %530 = vmatprep.subr.mxu0 0.0
    %531 = vmatpush1.msra.mxu0 0.0
    %532 = vmatprep.subr.mxu0 0.0
    %533 = vmatpush1.msra.mxu0 0.0
    %534 = vmatprep.subr.mxu0 0.0
    %535 = vmatpush1.msra.mxu0 0.0
    %536 = vmatprep.subr.mxu0 0.0
    %537 = vmatpush1.msra.mxu0 0.0
    %538 = vmatprep.subr.mxu0 0.0
    %539 = vmatpush1.msra.mxu0 0.0
    %540 = vmatprep.subr.mxu0 0.0
    %541 = vmatpush1.msra.mxu0 0.0
    %542 = vmatprep.mubr.f32.mxu0 0.0
    %543 = vmatmul.mubr.f32.gmra.mrb[0].mxu0 %v454
    %v544 = vpop.f32.mrb[0].mxu0
    %v545 = vadd.f32 %v476, %v544
    %v546 = vpop.f32.mrb[0].mxu0
    %547 = vdwg.mxu0
    %548 = vst [vmem:[#allocation10] sm:$0xff] %v545
    // Predicated region
    $region46: #{tpu_custom_call.1} parent=1 // pred_check
      _
    $region47: #{tpu_custom_call.1} parent=1 // pred_check_branch
      %550 = sbr.rel (0) target = $region49
    $region48: #{tpu_custom_call.1} parent=1 // pred_region
      %s552 = ssub.s32 128, 128
      %553 = vsyncadd [#allocation4], %s552
      %s555 = sshll.u32 [#allocation10], 4
      %s556 = int_to_ptr.vmem [resolvable:$true] %s555
      %558 = dma.vmem_to_hbm [thread:$0]  %s556, 128, %s7, [#allocation4]
    $region49: #{tpu_custom_call.1} parent=1 // pred_fallthru
      _
    // Predicated region
    $region50: #{tpu_custom_call.1} parent=1 // pred_check
      _
    $region51: #{tpu_custom_call.1} parent=1 // pred_check_branch
      %560 = sbr.rel (0) target = $region53
    $region52: #{tpu_custom_call.1} parent=1 // pred_region
      %561 = dma.done [#allocation4], 128
    $region53: #{tpu_custom_call.1} parent=1 // pred_fallthru
      _
    %562 = vsyncpa [#allocation3], 1
    %563 = vsyncpa [#allocation6], 1
    %564 = vsyncpa [#allocation9], 1
    %565 = vsyncpa [#allocation4], 1

</llo_original>
